<compile_context>
chip_gen: v7x
topology: tpu7x:2x2x1
jax: 0.10.0
libtpu: 0.0.40
codegen_flags: <defaults>
</compile_context>

<pallas_src>
import functools
import math

import jax
import jax.numpy as jnp
from jax.experimental import pallas as pl
from jax.experimental.pallas import tpu as pltpu


def _dpool_kernel(x_ref, o_ref, acc_ref, sp_ref, *,
                  scale, step_scaled, num_bins, feat, groups, tile_n, unroll):
    """x_ref:   (TNG, G*J)   f32  one tile of fused instance-group rows
       o_ref:   (M, J)       f32  normalized histogram for this bag (written at k==last)
       acc_ref: (M_pad, G*J) f32  VMEM accumulator, resident across the reduction axis
       sp_ref:  (M_pad, G*J) f32  VMEM sample-point table, pre-scaled by sqrt(-beta)
    """
    k = pl.program_id(1)
    last_k = pl.num_programs(1) - 1

    @pl.when(k == 0)
    def _init():
        # Sample points v_m = m/(M-1), already folded with sqrt(-beta).  Computed once
        # per bag block into VMEM (JAX does not CSE iota/broadcast across grid steps).
        sp_ref[...] = (jax.lax.broadcasted_iota(jnp.int32, sp_ref.shape, 0)
                       .astype(jnp.float32) * step_scaled)
        acc_ref[...] = jnp.zeros_like(acc_ref)

    sp = sp_ref[...]                               # (M_pad, G*J), lives in vregs

    def one_instance(n, acc):
        # Scale the (1, G*J) row once (hoists beta out of the (M_pad, G*J) hot loop);
        # the sublane broadcast is folded into the subtract.
        row = x_ref[pl.ds(n, 1), :] * scale        # (1, G*J)
        d = sp - row                               # (M_pad, G*J)
        return acc + jnp.exp(-(d * d))             # EUP-bound inner body

    def chunk(c, acc):
        base = pl.multiple_of(c * unroll, unroll)
        for u in range(unroll):                    # manual unroll for the LLO scheduler
            acc = one_instance(base + u, acc)
        return acc

    acc = acc_ref[...]
    n_chunks = tile_n // unroll                    # static
    if n_chunks > 0:
        acc = jax.lax.fori_loop(0, n_chunks, chunk, acc)
    for n in range(n_chunks * unroll, tile_n):     # static remainder (< unroll rows)
        acc = one_instance(n, acc)
    acc_ref[...] = acc

    @pl.when(k == last_k)
    def _finalize():
        a = acc[0:num_bins, :]                     # drop padded bin rows
        tot = a[:, 0:feat]                         # G-way lane-group reduction
        for g in range(1, groups):
            tot = tot + a[:, g * feat:(g + 1) * feat]
        norm = jnp.sum(tot, axis=0, keepdims=True)             # (1, J) sum over bins
        # NOTE: alfa cancels exactly here, so it is never multiplied in.
        o_ref[...] = tot * pl.reciprocal(norm, approx=False)


def _round_up(x, m):
    return -(-x // m) * m


def _pick_group_tile(num_groups, max_groups):
    """Largest instance-group tile that fits the VMEM budget; multiple of 8 when tiled."""
    if num_groups <= max_groups:
        return num_groups                          # full extent: always a legal block
    steps = -(-num_groups // max_groups)
    return _round_up(-(-num_groups // steps), 8)   # keeps grid padding tiny


def distribution_pooling_filter(data, num_bins=21, sigma=0.0167):
    """data: (B, N, J) float32 in [0, 1]  ->  (B, J, M) float32."""
    data = data.astype(jnp.float32)
    B, N, J = data.shape
    M = num_bins
    beta = -1.0 / (2.0 * sigma * sigma)
    scale = math.sqrt(-beta)                       # sqrt(-beta): hoists beta out of the loop
    inv_bin_step = 1.0 / (M - 1) if M > 1 else 0.0
    step_scaled = inv_bin_step * scale

    LANES = 128
    G = max(1, LANES // J)                         # instance groups fused into the lane axis
    GJ = G * J
    M_pad = _round_up(M, 8)

    # Generation-aware VMEM sizing (v7x: 64 MiB/TC, v5e/v6e: 128 MiB).
    try:
        vmem_cap = int(getattr(pltpu.get_tpu_info(), "vmem_capacity_bytes",
                               64 * 1024 * 1024))
    except Exception:
        vmem_cap = 64 * 1024 * 1024
    vmem_limit = min(vmem_cap // 2, 64 * 1024 * 1024)
    # Input tile is double-buffered by the pipeline; keep it to ~1/4 of the limit.
    max_groups = max(8, (vmem_limit // 4) // (2 * 4 * GJ))

    NG = -(-N // G)                                # number of fused instance groups
    TNG = _pick_group_tile(NG, max_groups)
    NG_pad = _round_up(NG, TNG)
    N_pad = NG_pad * G

    # Padded instances use a far out-of-range value so exp(beta*(v-x)^2) underflows to
    # exactly 0 (zero-padding would be wrong: exp(beta*v^2) != 0).
    if N_pad != N:
        data = jnp.pad(data, ((0, 0), (0, N_pad - N), (0, 0)), constant_values=1.0e4)
    xg = data.reshape(B, NG_pad, GJ)               # contiguous reshape, no data movement

    kernel = functools.partial(
        _dpool_kernel, scale=scale, step_scaled=step_scaled, num_bins=M,
        feat=J, groups=G, tile_n=TNG, unroll=8)

    # Grid: bags on the leading "parallel" axis (>= 2 blocks keeps both v7x TensorCores
    # busy whenever B >= 2); instance-group tiles on a trailing "arbitrary" reduction
    # axis with a resident accumulator + single finalize store.
    # TODO(synk): when B == 1, additionally split the instance axis across cores
    # (per-core partial accumulators + combine) so the second v7x TensorCore is not idle.
    out_mj = pl.pallas_call(
        kernel,
        out_shape=jax.ShapeDtypeStruct((B, M, J), jnp.float32),
        grid_spec=pltpu.PrefetchScalarGridSpec(
            num_scalar_prefetch=0,
            grid=(B, NG_pad // TNG),
            in_specs=[pl.BlockSpec((None, TNG, GJ), lambda b, k: (b, k, 0))],
            out_specs=pl.BlockSpec((None, M, J), lambda b, k: (b, 0, 0)),
            scratch_shapes=[
                pltpu.VMEM((M_pad, GJ), jnp.float32),   # lane-dense accumulator
                pltpu.VMEM((M_pad, GJ), jnp.float32),   # scaled sample-point table
            ],
        ),
        compiler_params=pltpu.CompilerParams(
            dimension_semantics=("parallel", "arbitrary"),
            vmem_limit_bytes=vmem_limit,
        ),
    )(xg)

    # Kernel writes a lane-dense (B, M, J) slab; restore the module layout (B, J, M).
    return jnp.swapaxes(out_mj, 1, 2)


def _reference(data, num_bins=21, sigma=0.0167):
    # Pure-JAX reference mirroring the PyTorch forward exactly (with alfa).
    alfa = 1.0 / math.sqrt(2.0 * math.pi * sigma ** 2)
    beta = -1.0 / (2.0 * sigma ** 2)
    sp = jnp.linspace(0.0, 1.0, num=num_bins, dtype=jnp.float32)
    diff = sp[None, None, None, :] - data[..., None]            # (B, N, J, M)
    result = alfa * jnp.exp(beta * diff ** 2)
    out_unnormalized = jnp.sum(result, axis=1)                  # (B, J, M)
    norm = jnp.sum(out_unnormalized, axis=2, keepdims=True)
    return out_unnormalized / norm


if __name__ == "__main__":
    key = jax.random.PRNGKey(0)
    num_bins, sigma = 21, 0.0167
    k1, k2, k3 = jax.random.split(key, 3)

    def make(k, shape):
        x = jax.random.normal(k, shape, jnp.float32) * 0.1 + 0.5   # mimic torch.normal(0.5, 0.1)
        return jnp.clip(x, 0.0, 1.0)

    cases = [
        make(k1, (2, 8, 32)),     # G=4 lane fusion, 2 parallel bag blocks
        make(k2, (1, 37, 16)),    # ragged N (padded 37 -> 40), G=8
        make(k3, (2, 200, 32)),   # exercises the unrolled fori_loop over instance groups
    ]

    for d in cases:
        out = jax.block_until_ready(
            distribution_pooling_filter(d, num_bins=num_bins, sigma=sigma))
        ref = _reference(d, num_bins=num_bins, sigma=sigma)
        assert out.shape == (d.shape[0], d.shape[2], num_bins)
        # rtol 1e-4: the in-kernel sqrt(-beta) pre-scaling (|beta| ~ 1793) shifts f32
        # rounding slightly relative to the reference formulation; still well within f32.
        assert jnp.allclose(out, ref, atol=1e-5, rtol=1e-4), float(
            jnp.max(jnp.abs(out - ref)))

    print("KERNEL_OK")
</pallas_src>

<mosaic_0001>
module attributes {stable_mosaic.version = 11 : i64} {
  func.func @_dpool_kernel(%arg0: i32, %arg1: i32, %arg2: memref<1x2x128xf32, #tpu.memory_space<vmem>>, %arg3: memref<1x21x32xf32, #tpu.memory_space<vmem>>, %arg4: memref<24x128xf32, #tpu.memory_space<vmem>>, %arg5: memref<24x128xf32, #tpu.memory_space<vmem>>) attributes {dimension_semantics = [#tpu.dimension_semantics<parallel>, #tpu.dimension_semantics<arbitrary>], iteration_bounds = array<i64: 2, 1>, scalar_prefetch = 0 : i64, scratch_operands = 2 : i64, tpu.core_type = #tpu.core_type<tc>, window_params = [{transform_indices = @transform_0, window_bounds = array<i64: 1, 2, 128>}, {transform_indices = @transform_1, window_bounds = array<i64: 1, 21, 32>}]} {
    %c0_i32 = arith.constant 0 : i32
    %0 = arith.cmpi eq, %arg1, %c0_i32 : i32
    %1 = arith.extui %0 : i1 to i32
    %c0_i32_0 = arith.constant 0 : i32
    %2 = arith.cmpi ne, %1, %c0_i32_0 : i32
    scf.if %2 {
      %31 = tpu.iota {dimensions = array<i32: 0>} : vector<24x128xi32>
      %32 = arith.sitofp %31 : vector<24x128xi32> to vector<24x128xf32>
      %cst_16 = arith.constant 2.11708617 : f32
      %33 = vector.broadcast %cst_16 : f32 to vector<24x128xf32>
      %34 = arith.mulf %32, %33 : vector<24x128xf32>
      %c0_17 = arith.constant 0 : index
      %c0_18 = arith.constant 0 : index
      %35 = vector.load %arg5[%c0_17, %c0_18] : memref<24x128xf32, #tpu.memory_space<vmem>>, vector<24x128xf32>
      tpu.vector_store %arg5[%c0_17, %c0_18], %34 {strides = array<i32>} : memref<24x128xf32, #tpu.memory_space<vmem>>, vector<24x128xf32>,
      %cst_19 = arith.constant 0.000000e+00 : f32
      %36 = vector.broadcast %cst_19 : f32 to vector<24x128xf32>
      %c0_20 = arith.constant 0 : index
      %c0_21 = arith.constant 0 : index
      %37 = vector.load %arg4[%c0_20, %c0_21] : memref<24x128xf32, #tpu.memory_space<vmem>>, vector<24x128xf32>
      tpu.vector_store %arg4[%c0_20, %c0_21], %36 {strides = array<i32>} : memref<24x128xf32, #tpu.memory_space<vmem>>, vector<24x128xf32>,
    } else {
    }
    %c0 = arith.constant 0 : index
    %c0_1 = arith.constant 0 : index
    %3 = vector.load %arg5[%c0, %c0_1] : memref<24x128xf32, #tpu.memory_space<vmem>>, vector<24x128xf32>
    %c0_2 = arith.constant 0 : index
    %c0_3 = arith.constant 0 : index
    %4 = vector.load %arg4[%c0_2, %c0_3] : memref<24x128xf32, #tpu.memory_space<vmem>>, vector<24x128xf32>
    %c0_4 = arith.constant 0 : index
    %c0_5 = arith.constant 0 : index
    %c0_6 = arith.constant 0 : index
    %5 = vector.load %arg2[%c0_4, %c0_5, %c0_6] : memref<1x2x128xf32, #tpu.memory_space<vmem>>, vector<1x1x128xf32>
    %6 = vector.shape_cast %5 : vector<1x1x128xf32> to vector<1x128xf32>
    %cst = arith.constant 42.3417244 : f32
    %7 = vector.broadcast %cst : f32 to vector<1x128xf32>
    %8 = arith.mulf %6, %7 : vector<1x128xf32>
    %9 = vector.broadcast %8 : vector<1x128xf32> to vector<24x128xf32>
    %10 = arith.subf %3, %9 : vector<24x128xf32>
    %11 = arith.mulf %10, %10 : vector<24x128xf32>
    %cst_7 = arith.constant 0.000000e+00 : f32
    %12 = vector.broadcast %cst_7 : f32 to vector<24x128xf32>
    %13 = arith.subf %12, %11 : vector<24x128xf32>
    %14 = math.exp %13 : vector<24x128xf32>
    %15 = arith.addf %4, %14 : vector<24x128xf32>
    %c0_8 = arith.constant 0 : index
    %c1 = arith.constant 1 : index
    %c0_9 = arith.constant 0 : index
    %16 = vector.load %arg2[%c0_8, %c1, %c0_9] : memref<1x2x128xf32, #tpu.memory_space<vmem>>, vector<1x1x128xf32>
    %17 = vector.shape_cast %16 : vector<1x1x128xf32> to vector<1x128xf32>
    %cst_10 = arith.constant 42.3417244 : f32
    %18 = vector.broadcast %cst_10 : f32 to vector<1x128xf32>
    %19 = arith.mulf %17, %18 : vector<1x128xf32>
    %20 = vector.broadcast %19 : vector<1x128xf32> to vector<24x128xf32>
    %21 = arith.subf %3, %20 : vector<24x128xf32>
    %22 = arith.mulf %21, %21 : vector<24x128xf32>
    %cst_11 = arith.constant 0.000000e+00 : f32
    %23 = vector.broadcast %cst_11 : f32 to vector<24x128xf32>
    %24 = arith.subf %23, %22 : vector<24x128xf32>
    %25 = math.exp %24 : vector<24x128xf32>
    %26 = arith.addf %15, %25 : vector<24x128xf32>
    %c0_12 = arith.constant 0 : index
    %c0_13 = arith.constant 0 : index
    %27 = vector.load %arg4[%c0_12, %c0_13] : memref<24x128xf32, #tpu.memory_space<vmem>>, vector<24x128xf32>
    tpu.vector_store %arg4[%c0_12, %c0_13], %26 {strides = array<i32>} : memref<24x128xf32, #tpu.memory_space<vmem>>, vector<24x128xf32>,
    %c0_i32_14 = arith.constant 0 : i32
    %28 = arith.cmpi eq, %arg1, %c0_i32_14 : i32
    %29 = arith.extui %28 : i1 to i32
    %c0_i32_15 = arith.constant 0 : i32
    %30 = arith.cmpi ne, %29, %c0_i32_15 : i32
    scf.if %30 {
      %31 = vector.extract_strided_slice %26 {offsets = [0, 0], sizes = [21, 128], strides = [1, 1]} : vector<24x128xf32> to vector<21x128xf32>
      %32 = vector.extract_strided_slice %31 {offsets = [0, 0], sizes = [21, 32], strides = [1, 1]} : vector<21x128xf32> to vector<21x32xf32>
      %33 = vector.extract_strided_slice %31 {offsets = [0, 32], sizes = [21, 32], strides = [1, 1]} : vector<21x128xf32> to vector<21x32xf32>
      %34 = arith.addf %32, %33 : vector<21x32xf32>
      %35 = vector.extract_strided_slice %31 {offsets = [0, 64], sizes = [21, 32], strides = [1, 1]} : vector<21x128xf32> to vector<21x32xf32>
      %36 = arith.addf %34, %35 : vector<21x32xf32>
      %37 = vector.extract_strided_slice %31 {offsets = [0, 96], sizes = [21, 32], strides = [1, 1]} : vector<21x128xf32> to vector<21x32xf32>
      %38 = arith.addf %36, %37 : vector<21x32xf32>
      %cst_16 = arith.constant dense<0.000000e+00> : vector<32xf32>
      %39 = vector.multi_reduction <add>, %38, %cst_16 [0] : vector<21x32xf32> to vector<32xf32>
      %40 = vector.shape_cast %39 : vector<32xf32> to vector<1x32xf32>
      %41 = tpu.reciprocal %40 : vector<1x32xf32> -> vector<1x32xf32>
      %42 = vector.broadcast %41 : vector<1x32xf32> to vector<21x32xf32>
      %43 = arith.mulf %38, %42 : vector<21x32xf32>
      %c0_17 = arith.constant 0 : index
      %c0_18 = arith.constant 0 : index
      %c0_19 = arith.constant 0 : index
      %44 = vector.load %arg3[%c0_17, %c0_18, %c0_19] : memref<1x21x32xf32, #tpu.memory_space<vmem>>, vector<1x21x32xf32>
      %45 = vector.shape_cast %44 : vector<1x21x32xf32> to vector<21x32xf32>
      %46 = vector.shape_cast %43 : vector<21x32xf32> to vector<1x21x32xf32>
      tpu.vector_store %arg3[%c0_17, %c0_18, %c0_19], %46 {strides = array<i32>} : memref<1x21x32xf32, #tpu.memory_space<vmem>>, vector<1x21x32xf32>,
    } else {
    }
    return
  }
  func.func @transform_0(%arg0: i32, %arg1: i32) -> (i32, i32, i32) {
    %c0_i32 = arith.constant 0 : i32
    %c0_i32_0 = arith.constant 0 : i32
    return %arg0, %arg1, %c0_i32 : i32, i32, i32
  }
  func.func @transform_1(%arg0: i32, %arg1: i32) -> (i32, i32, i32) {
    %c0_i32 = arith.constant 0 : i32
    %c0_i32_0 = arith.constant 0 : i32
    %c0_i32_1 = arith.constant 0 : i32
    return %arg0, %c0_i32, %c0_i32_0 : i32, i32, i32
  }
}

</mosaic_0001>

<llo_original>
// kernel: tpu_custom_call.1
$region0: #{tpu_custom_call.1}
  #allocation0 [shape = 'u32[]', space=smem, size = 0x4, offset = 0x4, fixed_abs, tag = 'smem constant byte address 0x4 - core index']
  #allocation1 [shape = 'u32[144,128]{1,0:T(1,128)}', space=vmem, size = 0x12000, scoped, tag = 'internal scratch']
  #allocation2 [shape = 'f32[24,128]{1,0:T(8,128)}', space=vmem, size = 0x3000, scoped, tag = 'scratch operand']
  #allocation3 [shape = 'f32[24,128]{1,0:T(8,128)}', space=vmem, size = 0x3000, scoped, tag = 'scratch operand']
  %s0 = inlined_call_operand.hbm [shape: f32[2,2,128], index: 0, kind: input, shape index: {}]
  %s1 = inlined_call_operand.vmem [shape: f32[2,21,32], index: 1, kind: output, shape index: {}]
  %s2 = sld [smem:[#allocation0]]
  $region49: #{tpu_custom_call.1} parent=0
    _
  %s4 = ssub.s32 1, %s2
  %s5 = scalar_select 0, %s4, %s2
  $region1: #{tpu_custom_call.1} parent=0
    #allocation4 [shape = 'u8[2048]{0}', space=vmem, size = 0x800, scoped, tag = 'input window, operand 0']
    #allocation5 [shape = 's32[2]{0}', space=sflag, size = 0x8, scoped, tag = 'scoped memory for tpu_custom_call.1']
    %6 = vsyncpa [#allocation5], 0
    %s7 = scalar_lea.sflag [#allocation5], 1
    %8 = vsyncpa %s7, 0
    loop: start=0, step=1, limit=4
    $region2: #{tpu_custom_call.1} parent=1 // loop_pre_header
      _
    $region3: #{tpu_custom_call.1} parent=1 // loop_header
      %s10 = sphi 0, %s14
      %p11 = scmp.ge.s32.totalorder %s10, 4
      %s17 = sphi 0, %s29
      %s18 = sphi 0, %s25
      %s19 = sphi 0, %s17
      %s20 = sphi 0, %s18
      %s21 = sphi 0, %s19
      %s22 = sphi 0, %s20
      %s34 = sphi 0, %s36
      %s37 = sphi 0, %s34
      %s38 = sphi 0, %s37
      %s54 = sphi 0, %s38
      %s60 = sphi 0, %s62
      %s63 = sphi 0, %s60
      %s64 = sphi 0, %s63
      %s80 = sphi 0, %s64
    $region4: #{tpu_custom_call.1} parent=1 // loop_header_branch
      %13 = sbr.rel (%p11) target = $region8
    $region5: #{tpu_custom_call.1} parent=1 // loop_body
      %s15 = ssub.s32 %s10, 1
      %s16 = ssub.s32 %s10, 2
      %s23 = sadd.s32 1, %s18
      %p24 = scmp.ge.s32.totalorder %s23, 1
      %s25 = scalar_select %p24, 0, %s23
      %s26 = sadd.s32 1, %s17
      %s27 = scalar_select %p24, %s26, %s17
      %p28 = scmp.ge.s32.totalorder %s27, 2
      %s29 = scalar_select %p28, 0, %s27
      %s30 = ssub.s32 %s17, %s29
      %s31 = ssub.s32 %s18, %s25
      %s32 = sor.u32 %s30, %s31
      %p33 = scmp.eq.s32.totalorder %s32, 0
      %s35 = sadd.s32 %s34, 1
      %s36 = scalar_select %p33, %s34, %s35
      %p39 = pneg %p33
      %p40 = scmp.eq.s32.totalorder %s10, 1
      %p41 = por %p39, %p40
      %p42 = scmp.ne.s32.totalorder %s34, %s37
      %p43 = scmp.eq.s32.totalorder %s10, 0
      %p44 = por %p42, %p43
      %p45 = scmp.ne.s32.totalorder %s34, %s37
      %p46 = scmp.eq.s32.totalorder %s15, 1
      %p47 = por %p45, %p46
      %p48 = scmp.ne.s32.totalorder %s37, %s38
      %p49 = scmp.eq.s32.totalorder %s15, 0
      %p50 = por %p48, %p49
      %p51 = scmp.ne.s32.totalorder %s37, %s38
      %p52 = scmp.eq.s32.totalorder %s16, 1
      %p53 = por %p51, %p52
      %p55 = scmp.ne.s32.totalorder %s38, %s54
      %p56 = scmp.eq.s32.totalorder %s16, 0
      %p57 = por %p55, %p56
      %s58 = ssub.s32 %s17, %s29
      %p59 = scmp.eq.s32.totalorder %s58, 0
      %s61 = sadd.s32 %s60, 1
      %s62 = scalar_select %p59, %s60, %s61
      %p65 = pneg %p59
      %p66 = scmp.eq.s32.totalorder %s10, 1
      %p67 = por %p65, %p66
      %p68 = scmp.ne.s32.totalorder %s60, %s63
      %p69 = scmp.eq.s32.totalorder %s10, 0
      %p70 = por %p68, %p69
      %p71 = scmp.ne.s32.totalorder %s60, %s63
      %p72 = scmp.eq.s32.totalorder %s15, 1
      %p73 = por %p71, %p72
      %p74 = scmp.ne.s32.totalorder %s63, %s64
      %p75 = scmp.eq.s32.totalorder %s15, 0
      %p76 = por %p74, %p75
      %p77 = scmp.ne.s32.totalorder %s63, %s64
      %p78 = scmp.eq.s32.totalorder %s16, 1
      %p79 = por %p77, %p78
      %p81 = scmp.ne.s32.totalorder %s64, %s80
      %p82 = scmp.eq.s32.totalorder %s16, 0
      %p83 = por %p81, %p82
      %p84 = scmp.le.s32.totalorder 1, %s10
      %p85 = scmp.lt.s32.totalorder %s10, 3
      %p86 = pnand %p84, %p85
      %p87 = pneg %p86
      // Predicated region
      $region9: #{tpu_custom_call.1} parent=5 // pred_check
        _
      $region10: #{tpu_custom_call.1} parent=5 // pred_check_branch
        %89 = sbr.rel (%p86) target = $region12
      $region11: #{tpu_custom_call.1} parent=5 // pred_region
        %s90 = ssub.s32 %s10, 1
      $region12: #{tpu_custom_call.1} parent=5 // pred_fallthru
        _
      %p91 = scmp.lt.s32.totalorder %s10, 2
      // Predicated region
      $region13: #{tpu_custom_call.1} parent=5 // pred_check
        %p92 = pneg %p91
      $region14: #{tpu_custom_call.1} parent=5 // pred_check_branch
        %94 = sbr.rel (%p92) target = $region16
      $region15: #{tpu_custom_call.1} parent=5 // pred_region
        // Predicated region
        $region17: #{tpu_custom_call.1} parent=15 // pred_check
          %p95 = pneg %p44
        $region18: #{tpu_custom_call.1} parent=15 // pred_check_branch
          %97 = sbr.rel (%p95) target = $region20
        $region19: #{tpu_custom_call.1} parent=15 // pred_region
          %s98 = sand.u32 %s34, 1
          %s99 = scalar_lea.sflag [#allocation5], %s98
          %s100 = sand.u32 %s34, 1
          %s101 = smul.addr %s100, 2
          %s102 = scalar_lea.vmem [#allocation4], %s101
          %s104 = ssub.s32 32, 32
          %105 = vsyncadd %s99, %s104
          %s106 = sadd.s32 %s18, %s17
          %s107 = smul.addr %s106, 32
          %s108 = scalar_lea.hbm %s0, %s107
          %s110 = sshll.u32 %s102, 4
          %s111 = int_to_ptr.vmem [resolvable:$true] %s110
          %113 = dma.hbm_to_vmem [thread:$0]  %s108, 32, %s111, %s99
        $region20: #{tpu_custom_call.1} parent=15 // pred_fallthru
          _
      $region16: #{tpu_custom_call.1} parent=5 // pred_fallthru
        _
      %p114 = scmp.le.s32.totalorder 1, %s10
      %p115 = scmp.lt.s32.totalorder %s10, 3
      %p116 = pnand %p114, %p115
      %p117 = pneg %p116
      // Predicated region
      $region21: #{tpu_custom_call.1} parent=5 // pred_check
        _
      $region22: #{tpu_custom_call.1} parent=5 // pred_check_branch
        %119 = sbr.rel (%p116) target = $region24
      $region23: #{tpu_custom_call.1} parent=5 // pred_region
        %s120 = ssub.s32 %s10, 1
        %s121 = sand.u32 %s37, 1
        %s122 = scalar_lea.sflag [#allocation5], %s121
        %s123 = sand.u32 %s37, 1
        %s124 = smul.addr %s123, 2
        %s125 = scalar_lea.vmem [#allocation4], %s124
        // Predicated region
        $region25: #{tpu_custom_call.1} parent=23 // pred_check
          %p126 = pneg %p50
        $region26: #{tpu_custom_call.1} parent=23 // pred_check_branch
          %128 = sbr.rel (%p126) target = $region28
        $region27: #{tpu_custom_call.1} parent=23 // pred_region
          %129 = dma.done %s122, 32
        $region28: #{tpu_custom_call.1} parent=23 // pred_fallthru
          _
        %s130 = sand.u32 %s37, 1
        %s131 = scalar_lea.sflag [#allocation5], %s130
        %s132 = sand.u32 %s37, 1
        %s133 = smul.addr %s132, 2
        %s134 = scalar_lea.vmem [#allocation4], %s133
        %p135 = pneg %p50
        %p136 = pneg %p47
        %p137 = pneg %p76
        %p138 = pneg %p73
        %p139 = scmp.lt.s32.totalorder %s19, 1
        %s140 = scalar_select %p139, %s19, 1
        %s141 = smul.addr %s140, 3
        %s142 = smul.addr %s141, 8
        %s143 = scalar_lea.vmem %s1, %s142
        %p144 = scmp.lt.s32.totalorder %s19, 1
        %s145 = scalar_select %p144, %s19, 1
        %s146 = smul.addr %s145, 3
        %s147 = smul.addr %s146, 8
        %s148 = scalar_lea.vmem %s1, %s147
        %p149 = scmp.eq.s32.totalorder %s20, 0
        // Predicated region
        $region29: #{tpu_custom_call.1} parent=23 // pred_check
          %p150 = pneg %p149
        $region30: #{tpu_custom_call.1} parent=23 // pred_check_branch
          %152 = sbr.rel (%p150) target = $region32
        $region31: #{tpu_custom_call.1} parent=23 // pred_region
          %v153 = vlaneseq
          %v154 = vshrl.u32 %v153, 7
          %v155 = vadd.s32 %v154, 8
          %v156 = vadd.s32 %v154, 16
          %v157 = vcvt.s32.f32 %v154
          %v158 = vcvt.s32.f32 %v155
          %v159 = vcvt.s32.f32 %v156
          %v160 = vmul.f32 %v157, 2.1170862
          %v161 = vmul.f32 %v158, 2.1170862
          %v162 = vmul.f32 %v159, 2.1170862
          %163 = vst [vmem:[#allocation3] sm:$0xff] %v160
          %164 = vst [vmem:[#allocation3 + $0x8] sm:$0xff] %v161
          %165 = vst [vmem:[#allocation3 + $0x10] sm:$0xff] %v162
          %166 = vst [vmem:[#allocation2] sm:$0xff] 0.0
          %167 = vst [vmem:[#allocation2 + $0x8] sm:$0xff] 0.0
          %168 = vst [vmem:[#allocation2 + $0x10] sm:$0xff] 0.0
        $region32: #{tpu_custom_call.1} parent=23 // pred_fallthru
          _
        %v169 = vld [vmem:[#allocation3] sm:$0xff]
        %v170 = vld [vmem:[#allocation3 + $0x8] sm:$0xff]
        %v171 = vld [vmem:[#allocation3 + $0x10] sm:$0xff]
        %v172 = vld [vmem:[#allocation2] sm:$0xff]
        %v173 = vld [vmem:[#allocation2 + $0x8] sm:$0xff]
        %v174 = vld [vmem:[#allocation2 + $0x10] sm:$0xff]
        %v175 = vld [vmem:[%s125] sm:$0x1]
        %v176 = vmul.f32 %v175, 42.341724
        %v177 = vlaneseq
        %v178 = vshrl.u32 %v177, 7
        %v179 = vsub.s32 0, %v178
        %v180 = vrot.slane %v176, %v179
        %v181 = vsub.f32 %v169, %v180
        %v182 = vsub.f32 %v170, %v180
        %v183 = vsub.f32 %v171, %v180
        %v184 = vmul.f32 %v181, %v181
        %v185 = vmul.f32 %v182, %v182
        %v186 = vmul.f32 %v183, %v183
        %v187 = vsub.f32 0.0, %v184
        %v188 = vsub.f32 0.0, %v185
        %v189 = vsub.f32 0.0, %v186
        %v190 = vmul.f32 %v187, 1.442695
        %v191 = vpow.pop %v190
        %v192 = vmul.f32 %v188, 1.442695
        %v193 = vpow.pop %v192
        %v194 = vmul.f32 %v189, 1.442695
        %v195 = vpow.pop %v194
        %v196 = vadd.f32 %v172, %v191
        %v197 = vadd.f32 %v173, %v193
        %v198 = vadd.f32 %v174, %v195
        %v199 = vld [vmem:[%s125 + $0x1] sm:$0x1]
        %v200 = vmul.f32 %v199, 42.341724
        %v201 = vlaneseq
        %v202 = vshrl.u32 %v201, 7
        %v203 = vsub.s32 0, %v202
        %v204 = vrot.slane %v200, %v203
        %v205 = vsub.f32 %v169, %v204
        %v206 = vsub.f32 %v170, %v204
        %v207 = vsub.f32 %v171, %v204
        %v208 = vmul.f32 %v205, %v205
        %v209 = vmul.f32 %v206, %v206
        %v210 = vmul.f32 %v207, %v207
        %v211 = vsub.f32 0.0, %v208
        %v212 = vsub.f32 0.0, %v209
        %v213 = vsub.f32 0.0, %v210
        %v214 = vmul.f32 %v211, 1.442695
        %v215 = vpow.pop %v214
        %v216 = vmul.f32 %v212, 1.442695
        %v217 = vpow.pop %v216
        %v218 = vmul.f32 %v213, 1.442695
        %v219 = vpow.pop %v218
        %v220 = vadd.f32 %v196, %v215
        %v221 = vadd.f32 %v197, %v217
        %v222 = vadd.f32 %v198, %v219
        %223 = vst [vmem:[#allocation2] sm:$0xff] %v220
        %224 = vst [vmem:[#allocation2 + $0x8] sm:$0xff] %v221
        %225 = vst [vmem:[#allocation2 + $0x10] sm:$0xff] %v222
        // Predicated region
        $region33: #{tpu_custom_call.1} parent=23 // pred_check
          %p226 = pneg %p149
        $region34: #{tpu_custom_call.1} parent=23 // pred_check_branch
          %228 = sbr.rel (%p226) target = $region36
        $region35: #{tpu_custom_call.1} parent=23 // pred_region
          %232 = vrot.lane.b32.xlu0 %v220, 96
          %v233 = vpop.permute.xlu0 %232
          %234 = vrot.lane.b32.xlu0 %v221, 96
          %v235 = vpop.permute.xlu0 %234
          %236 = vrot.lane.b32.xlu0 %v222, 96
          %v237 = vpop.permute.xlu0 %236
          %v241 = vadd.f32 %v220, %v233
          %v242 = vadd.f32 %v221, %v235
          %v243 = vadd.f32 %v222, %v237
          %244 = vrot.lane.b32.xlu0 %v220, 64
          %v245 = vpop.permute.xlu0 %244
          %246 = vrot.lane.b32.xlu0 %v221, 64
          %v247 = vpop.permute.xlu0 %246
          %248 = vrot.lane.b32.xlu0 %v222, 64
          %v249 = vpop.permute.xlu0 %248
          %v253 = vadd.f32 %v241, %v245
          %v254 = vadd.f32 %v242, %v247
          %v255 = vadd.f32 %v243, %v249
          %256 = vrot.lane.b32.xlu0 %v220, 32
          %v257 = vpop.permute.xlu0 %256
          %258 = vrot.lane.b32.xlu0 %v221, 32
          %v259 = vpop.permute.xlu0 %258
          %260 = vrot.lane.b32.xlu0 %v222, 32
          %v261 = vpop.permute.xlu0 %260
          %v265 = vadd.f32 %v253, %v257
          %v266 = vadd.f32 %v254, %v259
          %v267 = vadd.f32 %v255, %v261
          %vm268 = vcmask 261120
          %v269 = vsel %vm268, %v265, 0.0
          %v270 = vsel %vm268, %v266, 0.0
          %v271 = vadd.f32 %v269, %v270
          %vm272 = vcmask 258048
          %v273 = vsel %vm272, %v267, 0.0
          %v274 = vadd.f32 %v271, %v273
          %v275 = vrot.slane %v274, 4
          %v276 = vadd.f32 %v274, %v275
          %v277 = vrot.slane %v276, 2
          %v278 = vadd.f32 %v276, %v277
          %v279 = vrot.slane %v278, 1
          %v280 = vadd.f32 %v278, %v279
          %v281 = vrcp.pop %v280
          %v282 = vmul.f32 %v265, %v281
          %v283 = vmul.f32 %v266, %v281
          %v284 = vmul.f32 %v267, %v281
          %285 = vst.msk [vmem:[%s148] sm:$0xff] %vm268, %v282
          %286 = vst.msk [vmem:[%s148 + $0x8] sm:$0xff] %vm268, %v283
          %287 = vst.msk [vmem:[%s148 + $0x10] sm:$0x1f] %vm272, %v284
        $region36: #{tpu_custom_call.1} parent=23 // pred_fallthru
          _
        %p288 = scmp.lt.s32.totalorder %s19, 1
        %s289 = scalar_select %p288, %s19, 1
        %s290 = smul.addr %s289, 3
        %s291 = smul.addr %s290, 8
        %s292 = scalar_lea.vmem %s1, %s291
        // Predicated region
        $region37: #{tpu_custom_call.1} parent=23 // pred_check
          %p293 = pneg %p73
        $region38: #{tpu_custom_call.1} parent=23 // pred_check_branch
          %295 = sbr.rel (%p293) target = $region40
        $region39: #{tpu_custom_call.1} parent=23 // pred_region
          _
        $region40: #{tpu_custom_call.1} parent=23 // pred_fallthru
          _
      $region24: #{tpu_custom_call.1} parent=5 // pred_fallthru
        _
      %p296 = scmp.le.s32.totalorder 2, %s10
      // Predicated region
      $region41: #{tpu_custom_call.1} parent=5 // pred_check
        %p297 = pneg %p296
      $region42: #{tpu_custom_call.1} parent=5 // pred_check_branch
        %299 = sbr.rel (%p297) target = $region44
      $region43: #{tpu_custom_call.1} parent=5 // pred_region
        %s300 = ssub.s32 %s10, 2
        // Predicated region
        $region45: #{tpu_custom_call.1} parent=43 // pred_check
          %p301 = pneg %p79
        $region46: #{tpu_custom_call.1} parent=43 // pred_check_branch
          %303 = sbr.rel (%p301) target = $region48
        $region47: #{tpu_custom_call.1} parent=43 // pred_region
          %p304 = scmp.lt.s32.totalorder %s21, 1
          %s305 = scalar_select %p304, %s21, 1
          %s306 = smul.addr %s305, 3
          %s307 = smul.addr %s306, 8
          %s308 = scalar_lea.vmem %s1, %s307
        $region48: #{tpu_custom_call.1} parent=43 // pred_fallthru
          _
      $region44: #{tpu_custom_call.1} parent=5 // pred_fallthru
        _
    $region6: #{tpu_custom_call.1} parent=1 // loop_footer
      %s14 = sadd.s32 1, %s10
    $region7: #{tpu_custom_call.1} parent=1 // loop_footer_branch
      %9 = sbr.rel target = $region3
    $region8: #{tpu_custom_call.1} parent=1 // loop_exit
      _
    %309 = vsyncpa [#allocation5], 1
    %s310 = scalar_lea.sflag [#allocation5], 1
    %311 = vsyncpa %s310, 1

</llo_original>
